<compile_context>
chip_gen: v6e
topology: v6e:2x2x1
jax: 0.10.0
libtpu: 0.0.40
codegen_flags: <defaults>
</compile_context>

<pallas_src>
import functools

import jax
import jax.numpy as jnp
from jax.experimental import pallas as pl
from jax.experimental.pallas import tpu as pltpu


# ---------------------------------------------------------------------------
# Kernels
# ---------------------------------------------------------------------------

def _make_vpu_kernel(cin, cout):
    """Unrolled VPU path for tiny channel counts (weights/bias in SMEM)."""

    def kernel(w_ref, b_ref, x_ref, o_ref):
        # w_ref: SMEM (Cout, Cin) f32   b_ref: SMEM (Cout,) f32
        # x_ref: VMEM (nb, Cin, t)      o_ref: VMEM (nb, Cout, t)
        for oc in range(cout):
            acc = x_ref[:, 0, :].astype(jnp.float32) * w_ref[oc, 0]
            for ic in range(1, cin):
                acc = acc + x_ref[:, ic, :].astype(jnp.float32) * w_ref[oc, ic]
            o_ref[:, oc, :] = (acc + b_ref[oc]).astype(o_ref.dtype)

    return kernel


def _mxu_kernel(w_ref, b_ref, x_ref, o_ref):
    """MXU path for non-trivial channel counts."""
    # w_ref: VMEM (Cout, Cin)   b_ref: VMEM (Cout, 1) f32
    # x_ref: VMEM (nb, Cin, t)  o_ref: VMEM (nb, Cout, t)
    w = w_ref[...]
    b = b_ref[...]
    for i in range(x_ref.shape[0]):                      # nb is small and static
        acc = jnp.dot(w, x_ref[i], preferred_element_type=jnp.float32)
        o_ref[i] = (acc + b).astype(o_ref.dtype)


# ---------------------------------------------------------------------------
# Planning (all plain Python ints, computed outside jit)
# ---------------------------------------------------------------------------

def _vmem_plan():
    """Return (vmem_limit_bytes, streaming_budget_bytes) for the current chip."""
    default_vmem = 64 << 20            # assume the smallest (v7x per-TensorCore)
    try:
        info = pltpu.get_tpu_info()
        vmem_bytes = int(getattr(info, "vmem_capacity_bytes", default_vmem))
        if vmem_bytes <= 0:
            vmem_bytes = default_vmem
    except Exception:                  # API unavailable — stay conservative
        vmem_bytes = default_vmem
    # Scoped limit: well above the 16/32 MiB defaults, with headroom below physical.
    vmem_limit = max(min((vmem_bytes * 3) // 4, 96 << 20), 32 << 20)
    # Budget for the double-buffered x + out streaming payload.
    stream_budget = max(min(vmem_bytes // 4, 24 << 20), 8 << 20)
    return int(vmem_limit), int(stream_budget)


def _plan_blocks(n, cin, cout, hw, in_itemsize, out_itemsize, stream_budget):
    """Pick (nb images per step, spatial tile t) from the VMEM streaming budget."""
    per_lane = 2 * (cin * in_itemsize + cout * out_itemsize)   # x+out, double-buffered
    max_lanes = max(stream_budget // per_lane, 128)

    if hw <= max_lanes:
        t = hw                                             # full extent: always legal
        nb = int(min(n, max(1, max_lanes // max(hw, 1))))  # amortize small images
    else:
        t = max(128, (min(hw, max_lanes) // 128) * 128)    # lane-aligned tile
        nb = 1

    # Keep >= 2 grid steps when possible so v7x megacore can shard both TCs.
    steps = (-(-n // nb)) * (-(-hw // t))
    if steps < 2:
        if nb > 1:
            nb = (nb + 1) // 2
        elif t >= 256:
            t = max(128, ((t // 2) // 128) * 128)
    return int(nb), int(t)


# ---------------------------------------------------------------------------
# pallas_call wrapper
# ---------------------------------------------------------------------------

@functools.partial(jax.jit,
                   static_argnames=("nb", "tile_hw", "vmem_limit", "use_vpu"))
def _outconv_call(x_mat, w_mat, b_vec, *, nb, tile_hw, vmem_limit, use_vpu):
    n, cin, hw = x_mat.shape
    cout = w_mat.shape[0]
    t = tile_hw
    grid = (pl.cdiv(n, nb), pl.cdiv(hw, t))

    x_spec = pl.BlockSpec((nb, cin, t), lambda bi, si: (bi, 0, si))
    o_spec = pl.BlockSpec((nb, cout, t), lambda bi, si: (bi, 0, si))

    if use_vpu:
        kernel = _make_vpu_kernel(cin, cout)
        w_arg = w_mat.astype(jnp.float32)                  # scalars read from SMEM
        b_arg = b_vec.astype(jnp.float32)
        w_spec = pl.BlockSpec(memory_space=pltpu.MemorySpace.SMEM)
        b_spec = pl.BlockSpec(memory_space=pltpu.MemorySpace.SMEM)
    else:
        kernel = _mxu_kernel
        w_arg = w_mat.astype(x_mat.dtype)
        b_arg = b_vec.astype(jnp.float32).reshape(cout, 1)
        # NOTE: weight/bias blocks never change index; if the weights ever become
        # large (e.g. 512x512 bf16), adding pipeline_mode=pl.Buffered(1) here
        # frees the second pipeline buffer's VMEM.  Left at default for tiny weights.
        w_spec = pl.BlockSpec((cout, cin), lambda bi, si: (0, 0))
        b_spec = pl.BlockSpec((cout, 1), lambda bi, si: (0, 0))

    cost = pl.CostEstimate(
        flops=2 * n * hw * cin * cout,
        transcendentals=0,
        bytes_accessed=(x_mat.size * x_mat.dtype.itemsize
                        + w_arg.size * w_arg.dtype.itemsize
                        + b_arg.size * b_arg.dtype.itemsize
                        + n * cout * hw * x_mat.dtype.itemsize),
    )

    return pl.pallas_call(
        kernel,
        out_shape=jax.ShapeDtypeStruct((n, cout, hw), x_mat.dtype),
        grid_spec=pltpu.PrefetchScalarGridSpec(
            num_scalar_prefetch=0,
            grid=grid,
            in_specs=[w_spec, b_spec, x_spec],
            out_specs=o_spec,
        ),
        compiler_params=pltpu.CompilerParams(
            dimension_semantics=("parallel", "parallel"),
            vmem_limit_bytes=vmem_limit,
        ),
        cost_estimate=cost,
    )(w_arg, b_arg, x_mat)


def outconv(x_nchw, weight, bias):
    """1x1 conv (OutConv). x: (N, Cin, H, W); weight: (Cout, Cin, 1, 1); bias: (Cout,)."""
    n, cin, h, w = x_nchw.shape
    cout = weight.shape[0]
    hw = h * w

    vmem_limit, stream_budget = _vmem_plan()
    itemsize = x_nchw.dtype.itemsize
    nb, t = _plan_blocks(n, cin, cout, hw, itemsize, itemsize, stream_budget)
    use_vpu = (cin <= 8 and cout <= 8)

    x_mat = x_nchw.reshape(n, cin, hw)       # NCHW kept: reshape only, no transpose
    w_mat = weight.reshape(cout, cin)
    out = _outconv_call(x_mat, w_mat, bias,
                        nb=nb, tile_hw=t, vmem_limit=vmem_limit, use_vpu=use_vpu)
    return out.reshape(n, cout, h, w)


# ---------------------------------------------------------------------------
# Self-check
# ---------------------------------------------------------------------------

if __name__ == "__main__":
    key = jax.random.PRNGKey(0)
    k_x, k_w, k_b, k_x2, k_w2, k_b2 = jax.random.split(key, 6)

    def ref_conv1x1(x, w4, b):
        co, ci = w4.shape[:2]
        y = jnp.einsum("nchw,oc->nohw", x, w4.reshape(co, ci))
        return y + b[None, :, None, None]

    # Case 1: tiny channel counts -> unrolled VPU path (the OutConv regime).
    batch, in_ch, out_ch, spatial = 2, 4, 3, 16
    x = jax.random.normal(k_x, (batch, in_ch, spatial, spatial), jnp.float32)
    bound = 1.0 / (in_ch ** 0.5)      # mimics nn.Conv2d uniform init bound
    w = jax.random.uniform(k_w, (out_ch, in_ch, 1, 1), jnp.float32, -bound, bound)
    b = jax.random.uniform(k_b, (out_ch,), jnp.float32, -bound, bound)

    y = outconv(x, w, b)
    jax.block_until_ready(y)
    assert y.shape == (batch, out_ch, spatial, spatial)
    assert jnp.allclose(y, ref_conv1x1(x, w, b), atol=1e-4, rtol=1e-4)

    # Case 2: larger channel counts -> MXU path (still small shapes).
    in_ch2, out_ch2 = 32, 16
    x2 = jax.random.normal(k_x2, (batch, in_ch2, spatial, spatial), jnp.float32)
    bound2 = 1.0 / (in_ch2 ** 0.5)
    w2 = jax.random.uniform(k_w2, (out_ch2, in_ch2, 1, 1), jnp.float32, -bound2, bound2)
    b2 = jax.random.uniform(k_b2, (out_ch2,), jnp.float32, -bound2, bound2)

    y2 = outconv(x2, w2, b2)
    jax.block_until_ready(y2)
    assert jnp.allclose(y2, ref_conv1x1(x2, w2, b2), atol=1e-4, rtol=1e-4)

    print("KERNEL_OK")
</pallas_src>

<mosaic_0001>
module attributes {stable_mosaic.version = 11 : i64} {
  func.func @kernel(%arg0: i32, %arg1: i32, %arg2: memref<3x4xf32, #tpu.memory_space<smem>>, %arg3: memref<3xf32, #tpu.memory_space<smem>>, %arg4: memref<1x4x256xf32, #tpu.memory_space<vmem>>, %arg5: memref<1x3x256xf32, #tpu.memory_space<vmem>>) attributes {dimension_semantics = [#tpu.dimension_semantics<parallel>, #tpu.dimension_semantics<parallel>], iteration_bounds = array<i64: 2, 1>, scalar_prefetch = 0 : i64, scratch_operands = 0 : i64, tpu.core_type = #tpu.core_type<tc>, window_params = [{transform_indices = @transform_0, window_bounds = array<i64: 3, 4>}, {transform_indices = @transform_1, window_bounds = array<i64: 3>}, {transform_indices = @transform_2, window_bounds = array<i64: 1, 4, 256>}, {transform_indices = @transform_3, window_bounds = array<i64: 1, 3, 256>}]} {
    %c0 = arith.constant 0 : index
    %c0_0 = arith.constant 0 : index
    %c0_1 = arith.constant 0 : index
    %0 = vector.load %arg4[%c0, %c0_0, %c0_1] : memref<1x4x256xf32, #tpu.memory_space<vmem>>, vector<1x1x256xf32>
    %1 = vector.shape_cast %0 : vector<1x1x256xf32> to vector<1x256xf32>
    %c0_2 = arith.constant 0 : index
    %c0_3 = arith.constant 0 : index
    %2 = memref.load %arg2[%c0_2, %c0_3] : memref<3x4xf32, #tpu.memory_space<smem>>
    %3 = vector.broadcast %2 : f32 to vector<1x256xf32>
    %4 = arith.mulf %1, %3 : vector<1x256xf32>
    %c0_4 = arith.constant 0 : index
    %c1 = arith.constant 1 : index
    %c0_5 = arith.constant 0 : index
    %5 = vector.load %arg4[%c0_4, %c1, %c0_5] : memref<1x4x256xf32, #tpu.memory_space<vmem>>, vector<1x1x256xf32>
    %6 = vector.shape_cast %5 : vector<1x1x256xf32> to vector<1x256xf32>
    %c0_6 = arith.constant 0 : index
    %c1_7 = arith.constant 1 : index
    %7 = memref.load %arg2[%c0_6, %c1_7] : memref<3x4xf32, #tpu.memory_space<smem>>
    %8 = vector.broadcast %7 : f32 to vector<1x256xf32>
    %9 = arith.mulf %6, %8 : vector<1x256xf32>
    %10 = arith.addf %4, %9 : vector<1x256xf32>
    %c0_8 = arith.constant 0 : index
    %c2 = arith.constant 2 : index
    %c0_9 = arith.constant 0 : index
    %11 = vector.load %arg4[%c0_8, %c2, %c0_9] : memref<1x4x256xf32, #tpu.memory_space<vmem>>, vector<1x1x256xf32>
    %12 = vector.shape_cast %11 : vector<1x1x256xf32> to vector<1x256xf32>
    %c0_10 = arith.constant 0 : index
    %c2_11 = arith.constant 2 : index
    %13 = memref.load %arg2[%c0_10, %c2_11] : memref<3x4xf32, #tpu.memory_space<smem>>
    %14 = vector.broadcast %13 : f32 to vector<1x256xf32>
    %15 = arith.mulf %12, %14 : vector<1x256xf32>
    %16 = arith.addf %10, %15 : vector<1x256xf32>
    %c0_12 = arith.constant 0 : index
    %c3 = arith.constant 3 : index
    %c0_13 = arith.constant 0 : index
    %17 = vector.load %arg4[%c0_12, %c3, %c0_13] : memref<1x4x256xf32, #tpu.memory_space<vmem>>, vector<1x1x256xf32>
    %18 = vector.shape_cast %17 : vector<1x1x256xf32> to vector<1x256xf32>
    %c0_14 = arith.constant 0 : index
    %c3_15 = arith.constant 3 : index
    %19 = memref.load %arg2[%c0_14, %c3_15] : memref<3x4xf32, #tpu.memory_space<smem>>
    %20 = vector.broadcast %19 : f32 to vector<1x256xf32>
    %21 = arith.mulf %18, %20 : vector<1x256xf32>
    %22 = arith.addf %16, %21 : vector<1x256xf32>
    %c0_16 = arith.constant 0 : index
    %23 = memref.load %arg3[%c0_16] : memref<3xf32, #tpu.memory_space<smem>>
    %24 = vector.broadcast %23 : f32 to vector<1x256xf32>
    %25 = arith.addf %22, %24 : vector<1x256xf32>
    %c0_17 = arith.constant 0 : index
    %c0_18 = arith.constant 0 : index
    %c0_19 = arith.constant 0 : index
    %26 = vector.load %arg5[%c0_17, %c0_18, %c0_19] : memref<1x3x256xf32, #tpu.memory_space<vmem>>, vector<1x1x256xf32>
    %27 = vector.shape_cast %26 : vector<1x1x256xf32> to vector<1x256xf32>
    %28 = vector.shape_cast %25 : vector<1x256xf32> to vector<1x1x256xf32>
    tpu.vector_store %arg5[%c0_17, %c0_18, %c0_19], %28 {strides = array<i32>} : memref<1x3x256xf32, #tpu.memory_space<vmem>>, vector<1x1x256xf32>,
    %c0_20 = arith.constant 0 : index
    %c0_21 = arith.constant 0 : index
    %c0_22 = arith.constant 0 : index
    %29 = vector.load %arg4[%c0_20, %c0_21, %c0_22] : memref<1x4x256xf32, #tpu.memory_space<vmem>>, vector<1x1x256xf32>
    %30 = vector.shape_cast %29 : vector<1x1x256xf32> to vector<1x256xf32>
    %c1_23 = arith.constant 1 : index
    %c0_24 = arith.constant 0 : index
    %31 = memref.load %arg2[%c1_23, %c0_24] : memref<3x4xf32, #tpu.memory_space<smem>>
    %32 = vector.broadcast %31 : f32 to vector<1x256xf32>
    %33 = arith.mulf %30, %32 : vector<1x256xf32>
    %c0_25 = arith.constant 0 : index
    %c1_26 = arith.constant 1 : index
    %c0_27 = arith.constant 0 : index
    %34 = vector.load %arg4[%c0_25, %c1_26, %c0_27] : memref<1x4x256xf32, #tpu.memory_space<vmem>>, vector<1x1x256xf32>
    %35 = vector.shape_cast %34 : vector<1x1x256xf32> to vector<1x256xf32>
    %c1_28 = arith.constant 1 : index
    %c1_29 = arith.constant 1 : index
    %36 = memref.load %arg2[%c1_28, %c1_29] : memref<3x4xf32, #tpu.memory_space<smem>>
    %37 = vector.broadcast %36 : f32 to vector<1x256xf32>
    %38 = arith.mulf %35, %37 : vector<1x256xf32>
    %39 = arith.addf %33, %38 : vector<1x256xf32>
    %c0_30 = arith.constant 0 : index
    %c2_31 = arith.constant 2 : index
    %c0_32 = arith.constant 0 : index
    %40 = vector.load %arg4[%c0_30, %c2_31, %c0_32] : memref<1x4x256xf32, #tpu.memory_space<vmem>>, vector<1x1x256xf32>
    %41 = vector.shape_cast %40 : vector<1x1x256xf32> to vector<1x256xf32>
    %c1_33 = arith.constant 1 : index
    %c2_34 = arith.constant 2 : index
    %42 = memref.load %arg2[%c1_33, %c2_34] : memref<3x4xf32, #tpu.memory_space<smem>>
    %43 = vector.broadcast %42 : f32 to vector<1x256xf32>
    %44 = arith.mulf %41, %43 : vector<1x256xf32>
    %45 = arith.addf %39, %44 : vector<1x256xf32>
    %c0_35 = arith.constant 0 : index
    %c3_36 = arith.constant 3 : index
    %c0_37 = arith.constant 0 : index
    %46 = vector.load %arg4[%c0_35, %c3_36, %c0_37] : memref<1x4x256xf32, #tpu.memory_space<vmem>>, vector<1x1x256xf32>
    %47 = vector.shape_cast %46 : vector<1x1x256xf32> to vector<1x256xf32>
    %c1_38 = arith.constant 1 : index
    %c3_39 = arith.constant 3 : index
    %48 = memref.load %arg2[%c1_38, %c3_39] : memref<3x4xf32, #tpu.memory_space<smem>>
    %49 = vector.broadcast %48 : f32 to vector<1x256xf32>
    %50 = arith.mulf %47, %49 : vector<1x256xf32>
    %51 = arith.addf %45, %50 : vector<1x256xf32>
    %c1_40 = arith.constant 1 : index
    %52 = memref.load %arg3[%c1_40] : memref<3xf32, #tpu.memory_space<smem>>
    %53 = vector.broadcast %52 : f32 to vector<1x256xf32>
    %54 = arith.addf %51, %53 : vector<1x256xf32>
    %c0_41 = arith.constant 0 : index
    %c1_42 = arith.constant 1 : index
    %c0_43 = arith.constant 0 : index
    %55 = vector.load %arg5[%c0_41, %c1_42, %c0_43] : memref<1x3x256xf32, #tpu.memory_space<vmem>>, vector<1x1x256xf32>
    %56 = vector.shape_cast %55 : vector<1x1x256xf32> to vector<1x256xf32>
    %57 = vector.shape_cast %54 : vector<1x256xf32> to vector<1x1x256xf32>
    tpu.vector_store %arg5[%c0_41, %c1_42, %c0_43], %57 {strides = array<i32>} : memref<1x3x256xf32, #tpu.memory_space<vmem>>, vector<1x1x256xf32>,
    %c0_44 = arith.constant 0 : index
    %c0_45 = arith.constant 0 : index
    %c0_46 = arith.constant 0 : index
    %58 = vector.load %arg4[%c0_44, %c0_45, %c0_46] : memref<1x4x256xf32, #tpu.memory_space<vmem>>, vector<1x1x256xf32>
    %59 = vector.shape_cast %58 : vector<1x1x256xf32> to vector<1x256xf32>
    %c2_47 = arith.constant 2 : index
    %c0_48 = arith.constant 0 : index
    %60 = memref.load %arg2[%c2_47, %c0_48] : memref<3x4xf32, #tpu.memory_space<smem>>
    %61 = vector.broadcast %60 : f32 to vector<1x256xf32>
    %62 = arith.mulf %59, %61 : vector<1x256xf32>
    %c0_49 = arith.constant 0 : index
    %c1_50 = arith.constant 1 : index
    %c0_51 = arith.constant 0 : index
    %63 = vector.load %arg4[%c0_49, %c1_50, %c0_51] : memref<1x4x256xf32, #tpu.memory_space<vmem>>, vector<1x1x256xf32>
    %64 = vector.shape_cast %63 : vector<1x1x256xf32> to vector<1x256xf32>
    %c2_52 = arith.constant 2 : index
    %c1_53 = arith.constant 1 : index
    %65 = memref.load %arg2[%c2_52, %c1_53] : memref<3x4xf32, #tpu.memory_space<smem>>
    %66 = vector.broadcast %65 : f32 to vector<1x256xf32>
    %67 = arith.mulf %64, %66 : vector<1x256xf32>
    %68 = arith.addf %62, %67 : vector<1x256xf32>
    %c0_54 = arith.constant 0 : index
    %c2_55 = arith.constant 2 : index
    %c0_56 = arith.constant 0 : index
    %69 = vector.load %arg4[%c0_54, %c2_55, %c0_56] : memref<1x4x256xf32, #tpu.memory_space<vmem>>, vector<1x1x256xf32>
    %70 = vector.shape_cast %69 : vector<1x1x256xf32> to vector<1x256xf32>
    %c2_57 = arith.constant 2 : index
    %c2_58 = arith.constant 2 : index
    %71 = memref.load %arg2[%c2_57, %c2_58] : memref<3x4xf32, #tpu.memory_space<smem>>
    %72 = vector.broadcast %71 : f32 to vector<1x256xf32>
    %73 = arith.mulf %70, %72 : vector<1x256xf32>
    %74 = arith.addf %68, %73 : vector<1x256xf32>
    %c0_59 = arith.constant 0 : index
    %c3_60 = arith.constant 3 : index
    %c0_61 = arith.constant 0 : index
    %75 = vector.load %arg4[%c0_59, %c3_60, %c0_61] : memref<1x4x256xf32, #tpu.memory_space<vmem>>, vector<1x1x256xf32>
    %76 = vector.shape_cast %75 : vector<1x1x256xf32> to vector<1x256xf32>
    %c2_62 = arith.constant 2 : index
    %c3_63 = arith.constant 3 : index
    %77 = memref.load %arg2[%c2_62, %c3_63] : memref<3x4xf32, #tpu.memory_space<smem>>
    %78 = vector.broadcast %77 : f32 to vector<1x256xf32>
    %79 = arith.mulf %76, %78 : vector<1x256xf32>
    %80 = arith.addf %74, %79 : vector<1x256xf32>
    %c2_64 = arith.constant 2 : index
    %81 = memref.load %arg3[%c2_64] : memref<3xf32, #tpu.memory_space<smem>>
    %82 = vector.broadcast %81 : f32 to vector<1x256xf32>
    %83 = arith.addf %80, %82 : vector<1x256xf32>
    %c0_65 = arith.constant 0 : index
    %c2_66 = arith.constant 2 : index
    %c0_67 = arith.constant 0 : index
    %84 = vector.load %arg5[%c0_65, %c2_66, %c0_67] : memref<1x3x256xf32, #tpu.memory_space<vmem>>, vector<1x1x256xf32>
    %85 = vector.shape_cast %84 : vector<1x1x256xf32> to vector<1x256xf32>
    %86 = vector.shape_cast %83 : vector<1x256xf32> to vector<1x1x256xf32>
    tpu.vector_store %arg5[%c0_65, %c2_66, %c0_67], %86 {strides = array<i32>} : memref<1x3x256xf32, #tpu.memory_space<vmem>>, vector<1x1x256xf32>,
    return
  }
  func.func @transform_0(%arg0: i32, %arg1: i32) -> (i32, i32) {
    %c0_i32 = arith.constant 0 : i32
    %c0_i32_0 = arith.constant 0 : i32
    %c0_i32_1 = arith.constant 0 : i32
    return %c0_i32, %c0_i32_0 : i32, i32
  }
  func.func @transform_1(%arg0: i32, %arg1: i32) -> i32 {
    %c0_i32 = arith.constant 0 : i32
    %c0_i32_0 = arith.constant 0 : i32
    return %c0_i32 : i32
  }
  func.func @transform_2(%arg0: i32, %arg1: i32) -> (i32, i32, i32) {
    %c0_i32 = arith.constant 0 : i32
    %c0_i32_0 = arith.constant 0 : i32
    return %arg0, %c0_i32, %arg1 : i32, i32, i32
  }
  func.func @transform_3(%arg0: i32, %arg1: i32) -> (i32, i32, i32) {
    %c0_i32 = arith.constant 0 : i32
    %c0_i32_0 = arith.constant 0 : i32
    return %arg0, %c0_i32, %arg1 : i32, i32, i32
  }
}

</mosaic_0001>

<llo_original>
// kernel: _outconv_call.1
$region0: #{_outconv_call.1}
  #allocation0 [shape = 'u32[]', space=smem, size = 0x4, offset = 0x4, fixed_abs, tag = 'smem constant byte address 0x4 - core index']
  #allocation1 [shape = 'u32[144,128]{1,0:T(1,128)}', space=vmem, size = 0x12000, scoped, tag = 'internal scratch']
  %s0 = inlined_call_operand.hbm [shape: f32[3,4], index: 0, kind: input, shape index: {}]
  %s1 = inlined_call_operand.vmem [shape: f32[3], index: 1, kind: input, shape index: {}]
  %s2 = inlined_call_operand.hbm [shape: f32[2,4,256], index: 2, kind: input, shape index: {}]
  %s3 = inlined_call_operand.vmem [shape: f32[2,3,256], index: 3, kind: output, shape index: {}]
  %s4 = sld [smem:[#allocation0]]
  $region57: #{_outconv_call.1} parent=0
    _
  %s6 = ssub.s32 1, %s4
  %s7 = scalar_select 0, %s6, %s4
  $region1: #{_outconv_call.1} parent=0
    #allocation2 [shape = 'u8[2048]{0}', space=smem, size = 0x800, scoped, tag = 'input window, operand 0, single buffered']
    #allocation3 [shape = 's32[2]{0}', space=sflag, size = 0x8, scoped, tag = 'scoped memory for _outconv_call.1']
    #allocation4 [shape = 's32[2]{0}', space=sflag, size = 0x8, scoped, tag = 'scoped memory for _outconv_call.1']
    #allocation5 [shape = 's32[2]{0}', space=sflag, size = 0x8, scoped, tag = 'scoped memory for _outconv_call.1']
    #allocation6 [shape = 'u8[512]{0}', space=smem, size = 0x200, scoped, tag = 'input window, operand 1, single buffered']
    #allocation7 [shape = 'u8[8192]{0}', space=vmem, size = 0x2000, scoped, tag = 'input window, operand 2']
    %8 = vsyncpa [#allocation4], 0
    %9 = vsyncpa [#allocation5], 0
    %10 = vsyncpa [#allocation3], 0
    %s11 = scalar_lea.sflag [#allocation3], 1
    %12 = vsyncpa %s11, 0
    loop: start=0, step=1, limit=4
    $region2: #{_outconv_call.1} parent=1 // loop_pre_header
      _
    $region3: #{_outconv_call.1} parent=1 // loop_header
      %s14 = sphi 0, %s18
      %p15 = scmp.ge.s32.totalorder %s14, 4
      %s21 = sphi 0, %s33
      %s22 = sphi 0, %s29
      %s23 = sphi 0, %s21
      %s24 = sphi 0, %s22
      %s25 = sphi 0, %s23
      %s26 = sphi 0, %s24
      %s34 = sphi 0, %s34
      %s36 = sphi 0, %s34
      %s37 = sphi 0, %s36
      %s51 = sphi 0, %s37
      %s55 = sphi 0, %s55
      %s57 = sphi 0, %s55
      %s58 = sphi 0, %s57
      %s72 = sphi 0, %s58
      %s80 = sphi 0, %s82
      %s83 = sphi 0, %s80
      %s84 = sphi 0, %s83
      %s100 = sphi 0, %s84
      %s108 = sphi 0, %s110
      %s111 = sphi 0, %s108
      %s112 = sphi 0, %s111
      %s128 = sphi 0, %s112
    $region4: #{_outconv_call.1} parent=1 // loop_header_branch
      %17 = sbr.rel (%p15) target = $region8
    $region5: #{_outconv_call.1} parent=1 // loop_body
      %s19 = ssub.s32 %s14, 1
      %s20 = ssub.s32 %s14, 2
      %s27 = sadd.s32 1, %s22
      %p28 = scmp.ge.s32.totalorder %s27, 1
      %s29 = scalar_select %p28, 0, %s27
      %s30 = sadd.s32 1, %s21
      %s31 = scalar_select %p28, %s30, %s21
      %p32 = scmp.ge.s32.totalorder %s31, 2
      %s33 = scalar_select %p32, 0, %s31
      %s35 = sadd.s32 %s34, 1
      %p38 = scmp.eq.s32.totalorder %s14, 1
      %p39 = scmp.ne.s32.totalorder %s34, %s36
      %p40 = scmp.eq.s32.totalorder %s14, 0
      %p41 = por %p39, %p40
      %p42 = scmp.ne.s32.totalorder %s34, %s36
      %p43 = scmp.eq.s32.totalorder %s19, 1
      %p44 = por %p42, %p43
      %p45 = scmp.ne.s32.totalorder %s36, %s37
      %p46 = scmp.eq.s32.totalorder %s19, 0
      %p47 = por %p45, %p46
      %p48 = scmp.ne.s32.totalorder %s36, %s37
      %p49 = scmp.eq.s32.totalorder %s20, 1
      %p50 = por %p48, %p49
      %p52 = scmp.ne.s32.totalorder %s37, %s51
      %p53 = scmp.eq.s32.totalorder %s20, 0
      %p54 = por %p52, %p53
      %s56 = sadd.s32 %s55, 1
      %p59 = scmp.eq.s32.totalorder %s14, 1
      %p60 = scmp.ne.s32.totalorder %s55, %s57
      %p61 = scmp.eq.s32.totalorder %s14, 0
      %p62 = por %p60, %p61
      %p63 = scmp.ne.s32.totalorder %s55, %s57
      %p64 = scmp.eq.s32.totalorder %s19, 1
      %p65 = por %p63, %p64
      %p66 = scmp.ne.s32.totalorder %s57, %s58
      %p67 = scmp.eq.s32.totalorder %s19, 0
      %p68 = por %p66, %p67
      %p69 = scmp.ne.s32.totalorder %s57, %s58
      %p70 = scmp.eq.s32.totalorder %s20, 1
      %p71 = por %p69, %p70
      %p73 = scmp.ne.s32.totalorder %s58, %s72
      %p74 = scmp.eq.s32.totalorder %s20, 0
      %p75 = por %p73, %p74
      %s76 = ssub.s32 %s21, %s33
      %s77 = ssub.s32 %s22, %s29
      %s78 = sor.u32 %s76, %s77
      %p79 = scmp.eq.s32.totalorder %s78, 0
      %s81 = sadd.s32 %s80, 1
      %s82 = scalar_select %p79, %s80, %s81
      %p85 = pneg %p79
      %p86 = scmp.eq.s32.totalorder %s14, 1
      %p87 = por %p85, %p86
      %p88 = scmp.ne.s32.totalorder %s80, %s83
      %p89 = scmp.eq.s32.totalorder %s14, 0
      %p90 = por %p88, %p89
      %p91 = scmp.ne.s32.totalorder %s80, %s83
      %p92 = scmp.eq.s32.totalorder %s19, 1
      %p93 = por %p91, %p92
      %p94 = scmp.ne.s32.totalorder %s83, %s84
      %p95 = scmp.eq.s32.totalorder %s19, 0
      %p96 = por %p94, %p95
      %p97 = scmp.ne.s32.totalorder %s83, %s84
      %p98 = scmp.eq.s32.totalorder %s20, 1
      %p99 = por %p97, %p98
      %p101 = scmp.ne.s32.totalorder %s84, %s100
      %p102 = scmp.eq.s32.totalorder %s20, 0
      %p103 = por %p101, %p102
      %s104 = ssub.s32 %s21, %s33
      %s105 = ssub.s32 %s22, %s29
      %s106 = sor.u32 %s104, %s105
      %p107 = scmp.eq.s32.totalorder %s106, 0
      %s109 = sadd.s32 %s108, 1
      %s110 = scalar_select %p107, %s108, %s109
      %p113 = pneg %p107
      %p114 = scmp.eq.s32.totalorder %s14, 1
      %p115 = por %p113, %p114
      %p116 = scmp.ne.s32.totalorder %s108, %s111
      %p117 = scmp.eq.s32.totalorder %s14, 0
      %p118 = por %p116, %p117
      %p119 = scmp.ne.s32.totalorder %s108, %s111
      %p120 = scmp.eq.s32.totalorder %s19, 1
      %p121 = por %p119, %p120
      %p122 = scmp.ne.s32.totalorder %s111, %s112
      %p123 = scmp.eq.s32.totalorder %s19, 0
      %p124 = por %p122, %p123
      %p125 = scmp.ne.s32.totalorder %s111, %s112
      %p126 = scmp.eq.s32.totalorder %s20, 1
      %p127 = por %p125, %p126
      %p129 = scmp.ne.s32.totalorder %s112, %s128
      %p130 = scmp.eq.s32.totalorder %s20, 0
      %p131 = por %p129, %p130
      %p132 = scmp.le.s32.totalorder 1, %s14
      %p133 = scmp.lt.s32.totalorder %s14, 3
      %p134 = pnand %p132, %p133
      %p135 = pneg %p134
      // Predicated region
      $region9: #{_outconv_call.1} parent=5 // pred_check
        _
      $region10: #{_outconv_call.1} parent=5 // pred_check_branch
        %137 = sbr.rel (%p134) target = $region12
      $region11: #{_outconv_call.1} parent=5 // pred_region
        %s138 = ssub.s32 %s14, 1
        // Predicated region
        $region13: #{_outconv_call.1} parent=11 // pred_check
          %p139 = pneg %p47
        $region14: #{_outconv_call.1} parent=11 // pred_check_branch
          %141 = sbr.rel (%p139) target = $region16
        $region15: #{_outconv_call.1} parent=11 // pred_region
          %s143 = ssub.s32 64, 64
          %144 = vsyncadd [#allocation4], %s143
          %147 = dma.hbm_to_smem %s0, 64, [#allocation2], [#allocation4]
        $region16: #{_outconv_call.1} parent=11 // pred_fallthru
          _
        // Predicated region
        $region17: #{_outconv_call.1} parent=11 // pred_check
          %p148 = pneg %p68
        $region18: #{_outconv_call.1} parent=11 // pred_check_branch
          %150 = sbr.rel (%p148) target = $region20
        $region19: #{_outconv_call.1} parent=11 // pred_region
          %s152 = ssub.s32 16, 16
          %153 = vsyncadd [#allocation5], %s152
          %s155 = sshll.u32 %s1, 4
          %s156 = int_to_ptr.vmem [resolvable:$true] %s155
          %158 = dma.vmem_to_smem %s156, 16, [#allocation6], [#allocation5]
        $region20: #{_outconv_call.1} parent=11 // pred_fallthru
          _
      $region12: #{_outconv_call.1} parent=5 // pred_fallthru
        _
      %p159 = scmp.lt.s32.totalorder %s14, 2
      // Predicated region
      $region21: #{_outconv_call.1} parent=5 // pred_check
        %p160 = pneg %p159
      $region22: #{_outconv_call.1} parent=5 // pred_check_branch
        %162 = sbr.rel (%p160) target = $region24
      $region23: #{_outconv_call.1} parent=5 // pred_region
        // Predicated region
        $region25: #{_outconv_call.1} parent=23 // pred_check
          %p163 = pneg %p90
        $region26: #{_outconv_call.1} parent=23 // pred_check_branch
          %165 = sbr.rel (%p163) target = $region28
        $region27: #{_outconv_call.1} parent=23 // pred_region
          %s166 = sand.u32 %s80, 1
          %s167 = scalar_lea.sflag [#allocation3], %s166
          %s168 = sand.u32 %s80, 1
          %s169 = smul.addr %s168, 8
          %s170 = scalar_lea.vmem [#allocation7], %s169
          %s171 = smul.u32 2, %s22
          %s173 = ssub.s32 128, 128
          %174 = vsyncadd %s167, %s173
          %s175 = smul.addr %s21, 2
          %s176 = sadd.s32 %s171, %s175
          %s177 = smul.addr %s176, 64
          %s178 = scalar_lea.hbm %s2, %s177
          %s180 = sshll.u32 %s170, 4
          %s181 = int_to_ptr.vmem [resolvable:$true] %s180
          %183 = dma.hbm_to_vmem [thread:$0]  %s178, 128, %s181, %s167
        $region28: #{_outconv_call.1} parent=23 // pred_fallthru
          _
      $region24: #{_outconv_call.1} parent=5 // pred_fallthru
        _
      %p184 = scmp.le.s32.totalorder 1, %s14
      %p185 = scmp.lt.s32.totalorder %s14, 3
      %p186 = pnand %p184, %p185
      %p187 = pneg %p186
      // Predicated region
      $region29: #{_outconv_call.1} parent=5 // pred_check
        _
      $region30: #{_outconv_call.1} parent=5 // pred_check_branch
        %189 = sbr.rel (%p186) target = $region32
      $region31: #{_outconv_call.1} parent=5 // pred_region
        %s190 = ssub.s32 %s14, 1
        // Predicated region
        $region33: #{_outconv_call.1} parent=31 // pred_check
          %p191 = pneg %p47
        $region34: #{_outconv_call.1} parent=31 // pred_check_branch
          %193 = sbr.rel (%p191) target = $region36
        $region35: #{_outconv_call.1} parent=31 // pred_region
          %194 = dma.done [#allocation4], 64
        $region36: #{_outconv_call.1} parent=31 // pred_fallthru
          _
        // Predicated region
        $region37: #{_outconv_call.1} parent=31 // pred_check
          %p195 = pneg %p68
        $region38: #{_outconv_call.1} parent=31 // pred_check_branch
          %197 = sbr.rel (%p195) target = $region40
        $region39: #{_outconv_call.1} parent=31 // pred_region
          %198 = dma.done [#allocation5], 16
        $region40: #{_outconv_call.1} parent=31 // pred_fallthru
          _
        %s199 = sand.u32 %s83, 1
        %s200 = scalar_lea.sflag [#allocation3], %s199
        %s201 = sand.u32 %s83, 1
        %s202 = smul.addr %s201, 8
        %s203 = scalar_lea.vmem [#allocation7], %s202
        // Predicated region
        $region41: #{_outconv_call.1} parent=31 // pred_check
          %p204 = pneg %p96
        $region42: #{_outconv_call.1} parent=31 // pred_check_branch
          %206 = sbr.rel (%p204) target = $region44
        $region43: #{_outconv_call.1} parent=31 // pred_region
          %207 = dma.done %s200, 128
        $region44: #{_outconv_call.1} parent=31 // pred_fallthru
          _
        %208 = sfence
        %p209 = pneg %p47
        %p210 = pneg %p44
        %p211 = pneg %p68
        %p212 = pneg %p65
        %s213 = sand.u32 %s83, 1
        %s214 = scalar_lea.sflag [#allocation3], %s213
        %s215 = sand.u32 %s83, 1
        %s216 = smul.addr %s215, 8
        %s217 = scalar_lea.vmem [#allocation7], %s216
        %p218 = pneg %p96
        %p219 = pneg %p93
        %p220 = pneg %p124
        %p221 = pneg %p121
        %s222 = smul.u32 2, %s24
        %p223 = scmp.lt.s32.totalorder %s23, 1
        %s224 = scalar_select %p223, %s23, 1
        %p225 = scmp.lt.s32.totalorder %s222, 1
        %s226 = scalar_select %p225, %s222, 1
        %s227 = smul.addr %s224, 2
        %s228 = sadd.s32 %s226, %s227
        %s229 = smul.addr %s228, 4
        %s230 = scalar_lea.vmem %s3, %s229
        %s231 = smul.u32 2, %s24
        %s232 = smul.u32 2, %s24
        %p233 = scmp.lt.s32.totalorder %s23, 1
        %s234 = scalar_select %p233, %s23, 1
        %p235 = scmp.lt.s32.totalorder %s232, 1
        %s236 = scalar_select %p235, %s232, 1
        %s237 = smul.addr %s234, 2
        %s238 = sadd.s32 %s236, %s237
        %s239 = smul.addr %s238, 4
        %s240 = scalar_lea.vmem %s3, %s239
        %s241 = smul.u32 2, %s24
        %v242 = vld [vmem:[%s203] ss:$4 sm:$0x3]
        %s243 = sld [smem:[#allocation2]]
        %v244 = vstv %s243
        %v245 = vmul.f32 %v242, %v244
        %s246 = scalar_lea.vmem %s203, 1 [#allocation7]
        %v247 = vld [vmem:[%s246] ss:$4 sm:$0x3]
        %s248 = sld [smem:[#allocation2 + $0x1]]
        %v249 = vstv %s248
        %v250 = vmul.f32 %v247, %v249
        %v251 = vadd.f32 %v245, %v250
        %s252 = scalar_lea.vmem %s203, 2 [#allocation7]
        %v253 = vld [vmem:[%s252] ss:$4 sm:$0x3]
        %s254 = sld [smem:[#allocation2 + $0x2]]
        %v255 = vstv %s254
        %v256 = vmul.f32 %v253, %v255
        %v257 = vadd.f32 %v251, %v256
        %s258 = scalar_lea.vmem %s203, 3 [#allocation7]
        %v259 = vld [vmem:[%s258] ss:$4 sm:$0x3]
        %s260 = sld [smem:[#allocation2 + $0x3]]
        %v261 = vstv %s260
        %v262 = vmul.f32 %v259, %v261
        %v263 = vadd.f32 %v257, %v262
        %s264 = sld [smem:[#allocation6]]
        %v265 = vstv %s264
        %v266 = vadd.f32 %v263, %v265
        %v267 = vlaneseq
        %vm268 = vcmp.ge.s32.totalorder %v267, 0
        %vm269 = vcmp.lt.s32.totalorder %v267, 256
        %vm270 = vmand %vm268, %vm269
        %271 = vst.msk [vmem:[%s240] ss:$4 sm:$0x3] %vm270, %v266
        %v272 = vld [vmem:[%s203] ss:$4 sm:$0x3]
        %s273 = sld [smem:[#allocation2 + $0x80]]
        %v274 = vstv %s273
        %v275 = vmul.f32 %v272, %v274
        %v276 = vld [vmem:[%s246] ss:$4 sm:$0x3]
        %s277 = sld [smem:[#allocation2 + $0x81]]
        %v278 = vstv %s277
        %v279 = vmul.f32 %v276, %v278
        %v280 = vadd.f32 %v275, %v279
        %v281 = vld [vmem:[%s252] ss:$4 sm:$0x3]
        %s282 = sld [smem:[#allocation2 + $0x82]]
        %v283 = vstv %s282
        %v284 = vmul.f32 %v281, %v283
        %v285 = vadd.f32 %v280, %v284
        %v286 = vld [vmem:[%s258] ss:$4 sm:$0x3]
        %s287 = sld [smem:[#allocation2 + $0x83]]
        %v288 = vstv %s287
        %v289 = vmul.f32 %v286, %v288
        %v290 = vadd.f32 %v285, %v289
        %s291 = sld [smem:[#allocation6 + $0x1]]
        %v292 = vstv %s291
        %v293 = vadd.f32 %v290, %v292
        %s294 = scalar_lea.vmem %s240, 1
        %295 = vst.msk [vmem:[%s294] ss:$4 sm:$0x3] %vm270, %v293
        %v296 = vld [vmem:[%s203] ss:$4 sm:$0x3]
        %s297 = sld [smem:[#allocation2 + $0x100]]
        %v298 = vstv %s297
        %v299 = vmul.f32 %v296, %v298
        %v300 = vld [vmem:[%s246] ss:$4 sm:$0x3]
        %s301 = sld [smem:[#allocation2 + $0x101]]
        %v302 = vstv %s301
        %v303 = vmul.f32 %v300, %v302
        %v304 = vadd.f32 %v299, %v303
        %v305 = vld [vmem:[%s252] ss:$4 sm:$0x3]
        %s306 = sld [smem:[#allocation2 + $0x102]]
        %v307 = vstv %s306
        %v308 = vmul.f32 %v305, %v307
        %v309 = vadd.f32 %v304, %v308
        %v310 = vld [vmem:[%s258] ss:$4 sm:$0x3]
        %s311 = sld [smem:[#allocation2 + $0x103]]
        %v312 = vstv %s311
        %v313 = vmul.f32 %v310, %v312
        %v314 = vadd.f32 %v309, %v313
        %s315 = sld [smem:[#allocation6 + $0x2]]
        %v316 = vstv %s315
        %v317 = vadd.f32 %v314, %v316
        %s318 = scalar_lea.vmem %s240, 2
        %319 = vst.msk [vmem:[%s318] ss:$4 sm:$0x3] %vm270, %v317
        %s320 = smul.u32 2, %s24
        %p321 = scmp.lt.s32.totalorder %s23, 1
        %s322 = scalar_select %p321, %s23, 1
        %p323 = scmp.lt.s32.totalorder %s320, 1
        %s324 = scalar_select %p323, %s320, 1
        %s325 = smul.addr %s322, 2
        %s326 = sadd.s32 %s324, %s325
        %s327 = smul.addr %s326, 4
        %s328 = scalar_lea.vmem %s3, %s327
        // Predicated region
        $region45: #{_outconv_call.1} parent=31 // pred_check
          %p329 = pneg %p121
        $region46: #{_outconv_call.1} parent=31 // pred_check_branch
          %331 = sbr.rel (%p329) target = $region48
        $region47: #{_outconv_call.1} parent=31 // pred_region
          %s332 = smul.u32 2, %s24
        $region48: #{_outconv_call.1} parent=31 // pred_fallthru
          _
      $region32: #{_outconv_call.1} parent=5 // pred_fallthru
        _
      %p333 = scmp.le.s32.totalorder 2, %s14
      // Predicated region
      $region49: #{_outconv_call.1} parent=5 // pred_check
        %p334 = pneg %p333
      $region50: #{_outconv_call.1} parent=5 // pred_check_branch
        %336 = sbr.rel (%p334) target = $region52
      $region51: #{_outconv_call.1} parent=5 // pred_region
        %s337 = ssub.s32 %s14, 2
        // Predicated region
        $region53: #{_outconv_call.1} parent=51 // pred_check
          %p338 = pneg %p127
        $region54: #{_outconv_call.1} parent=51 // pred_check_branch
          %340 = sbr.rel (%p338) target = $region56
        $region55: #{_outconv_call.1} parent=51 // pred_region
          %s341 = smul.u32 2, %s26
          %p342 = scmp.lt.s32.totalorder %s25, 1
          %s343 = scalar_select %p342, %s25, 1
          %p344 = scmp.lt.s32.totalorder %s341, 1
          %s345 = scalar_select %p344, %s341, 1
          %s346 = smul.addr %s343, 2
          %s347 = sadd.s32 %s345, %s346
          %s348 = smul.addr %s347, 4
          %s349 = scalar_lea.vmem %s3, %s348
        $region56: #{_outconv_call.1} parent=51 // pred_fallthru
          _
      $region52: #{_outconv_call.1} parent=5 // pred_fallthru
        _
    $region6: #{_outconv_call.1} parent=1 // loop_footer
      %s18 = sadd.s32 1, %s14
    $region7: #{_outconv_call.1} parent=1 // loop_footer_branch
      %13 = sbr.rel target = $region3
    $region8: #{_outconv_call.1} parent=1 // loop_exit
      _
    %350 = vsyncpa [#allocation3], 1
    %s351 = scalar_lea.sflag [#allocation3], 1
    %352 = vsyncpa %s351, 1
    %353 = vsyncpa [#allocation4], 1
    %s354 = scalar_lea.sflag [#allocation4], 1
    %355 = vsyncpa %s354, 1
    %356 = vsyncpa [#allocation5], 1
    %s357 = scalar_lea.sflag [#allocation5], 1
    %358 = vsyncpa %s357, 1

</llo_original>
